<compile_context>
chip_gen: v7x
topology: tpu7x:2x2x1
jax: 0.10.0
libtpu: 0.0.40
codegen_flags: <defaults>
</compile_context>

<pallas_src>
import functools

import jax
import jax.numpy as jnp
from jax.experimental import pallas as pl
from jax.experimental.pallas import tpu as pltpu

_TM_MAX = 4096      # max batch-tile rows: big tiles amortize the ~0.35 us/grid-step cost;
                    # at 4096 rows the whole working set is ~6.5 MiB, well under the 32 MiB
                    # scoped VMEM default on every generation (incl. v7x's 64 MiB physical).
_ROW_ALIGN = 16     # keep tiles a multiple of 16 rows (bf16 packs 16 rows/vreg)
_MIN_SPLIT = 512    # only force a 2-step grid (v7x megacore) once tiles are >=256 rows each


def _round_up(x, m):
    return ((x + m - 1) // m) * m


def _choose_tile(batch):
    padded = _round_up(batch, _ROW_ALIGN)
    tm = min(_TM_MAX, padded)
    # v7x megacore: dimension_semantics=("parallel",) only uses the 2nd TensorCore when
    # there are >=2 grid steps; split large batches into at least two tiles.
    if padded >= _MIN_SPLIT and padded // tm < 2:
        tm = _round_up(pl.cdiv(padded, 2), _ROW_ALIGN)
    padded = _round_up(batch, tm)
    return tm, padded


def _mlp_kernel(x_ref, w1_ref, b1_ref, w2_ref, b2_ref, w3_ref, b3_ref, o_ref):
    # fp32 x -> bf16 in-kernel (free VPU work hidden under the DMA); matmuls run on the
    # MXU with fp32 accumulation; bias add + ReLU epilogue stay fp32.
    x = x_ref[...].astype(jnp.bfloat16)
    h1 = jnp.dot(x, w1_ref[...], preferred_element_type=jnp.float32) + b1_ref[...]
    h1 = jnp.maximum(h1, 0.0)
    # TODO(synk): training-mode dropout (p=0.2) omitted; eval-mode forward is identity.
    h2 = jnp.dot(h1.astype(jnp.bfloat16), w2_ref[...],
                 preferred_element_type=jnp.float32) + b2_ref[...]
    h2 = jnp.maximum(h2, 0.0)
    out = jnp.dot(h2.astype(jnp.bfloat16), w3_ref[...],
                  preferred_element_type=jnp.float32) + b3_ref[...]
    o_ref[...] = out.astype(o_ref.dtype)


@jax.jit
def logistic_regression_forward(x, w1b, b1, w2b, b2, w3b, b3):
    """x: fp32 [batch, in]; w*b: bf16 [in, out]; b*: fp32 [1, out] (see prepare_params)."""
    batch, input_dim = x.shape
    h1_dim = w1b.shape[1]
    h2_dim = w2b.shape[1]
    output_dim = w3b.shape[1]

    tm, padded_batch = _choose_tile(batch)
    if padded_batch != batch:
        x = jnp.pad(x, ((0, padded_batch - batch), (0, 0)))
    grid = (padded_batch // tm,)

    # Weights/biases stay VMEM-resident across batch tiles (constant index_map); they are
    # tiny (~40 KiB), so a custom pipeline_mode/Buffered(1) buys nothing here.
    def resident(shape):
        return pl.BlockSpec(shape, lambda i: (0,) * len(shape))

    flops = 2 * padded_batch * (input_dim * h1_dim + h1_dim * h2_dim + h2_dim * output_dim)
    bytes_accessed = (x.size * 4                                     # fp32 activations in
                      + (w1b.size + w2b.size + w3b.size) * 2         # bf16 weights
                      + (b1.size + b2.size + b3.size) * 4            # fp32 biases
                      + padded_batch * output_dim * 4)               # fp32 narrow output

    out = pl.pallas_call(
        _mlp_kernel,
        out_shape=jax.ShapeDtypeStruct((padded_batch, output_dim), jnp.float32),
        grid=grid,
        in_specs=[
            pl.BlockSpec((tm, input_dim), lambda i: (i, 0)),   # streamed fp32 activations
            resident(w1b.shape), resident(b1.shape),
            resident(w2b.shape), resident(b2.shape),
            resident(w3b.shape), resident(b3.shape),
        ],
        # Narrow (un-padded) output slab: stores are masked, but writeback bytes drop
        # ~13x vs a 128-lane fp32 pad — the right trade in this HBM-bound regime.
        out_specs=pl.BlockSpec((tm, output_dim), lambda i: (i, 0)),
        compiler_params=pltpu.CompilerParams(
            dimension_semantics=("parallel",),     # shard batch tiles across v7x's 2 TCs
            vmem_limit_bytes=32 * 1024 * 1024,     # plenty for tm<=4096 on all generations
        ),
        cost_estimate=pl.CostEstimate(
            flops=flops, transcendentals=0, bytes_accessed=bytes_accessed),
    )(x, w1b, b1, w2b, b2, w3b, b3)

    return out[:batch]  # strip batch padding (no lane padding to strip)


def prepare_params(w1, b1, w2, b2, w3, b3):
    """One-time parameter prep, kept OUT of the jitted forward: bf16 MXU weights,
    2-D fp32 biases. Call once, reuse across forward calls."""
    def as_bias(b):
        return jnp.asarray(b, jnp.float32).reshape(1, -1)
    return (jnp.asarray(w1, jnp.bfloat16), as_bias(b1),
            jnp.asarray(w2, jnp.bfloat16), as_bias(b2),
            jnp.asarray(w3, jnp.bfloat16), as_bias(b3))


def init_params(key, input_dim, output_dim):
    """Deterministic init mimicking PyTorch nn.Linear default (U[-1/sqrt(fan_in), +])."""
    dims = [(input_dim, 128), (128, 64), (64, output_dim)]
    params = []
    for fan_in, fan_out in dims:
        key, kw, kb = jax.random.split(key, 3)
        bound = 1.0 / jnp.sqrt(fan_in)
        # stored as [in, out] (transpose of PyTorch's [out, in])
        w = jax.random.uniform(kw, (fan_in, fan_out), jnp.float32, -bound, bound)
        b = jax.random.uniform(kb, (1, fan_out), jnp.float32, -bound, bound)
        params += [w, b]
    return params


if __name__ == "__main__":
    input_dim = 32
    output_dim = 10
    batch = 8

    key = jax.random.PRNGKey(0)
    key, kx = jax.random.split(key)
    x = jax.random.normal(kx, (batch, input_dim), jnp.float32)

    w1, b1, w2, b2, w3, b3 = init_params(key, input_dim, output_dim)
    prepared = prepare_params(w1, b1, w2, b2, w3, b3)

    out = logistic_regression_forward(x, *prepared)
    out = jax.block_until_ready(out)
    assert out.shape == (batch, output_dim)
    assert out.dtype == jnp.float32

    # reference check in plain JAX (fp32 math; kernel uses bf16 matmul operands with
    # fp32 accumulation, so compare with a correspondingly loose tolerance)
    ref = jnp.maximum(x @ w1 + b1, 0.0)
    ref = jnp.maximum(ref @ w2 + b2, 0.0)
    ref = ref @ w3 + b3
    assert jnp.allclose(out, ref, atol=5e-2, rtol=5e-2), (
        f"max abs err {jnp.max(jnp.abs(out - ref))}")

    print("KERNEL_OK")
</pallas_src>

<mosaic_0001>
module attributes {stable_mosaic.version = 11 : i64} {
  func.func @_mlp_kernel(%arg0: i32, %arg1: memref<16x32xf32, #tpu.memory_space<vmem>>, %arg2: memref<32x128xbf16, #tpu.memory_space<vmem>>, %arg3: memref<1x128xf32, #tpu.memory_space<vmem>>, %arg4: memref<128x64xbf16, #tpu.memory_space<vmem>>, %arg5: memref<1x64xf32, #tpu.memory_space<vmem>>, %arg6: memref<64x10xbf16, #tpu.memory_space<vmem>>, %arg7: memref<1x10xf32, #tpu.memory_space<vmem>>, %arg8: memref<16x10xf32, #tpu.memory_space<vmem>>) attributes {dimension_semantics = [#tpu.dimension_semantics<parallel>], iteration_bounds = array<i64: 1>, scalar_prefetch = 0 : i64, scratch_operands = 0 : i64, tpu.core_type = #tpu.core_type<tc>, window_params = [{transform_indices = @transform_0, window_bounds = array<i64: 16, 32>}, {pipeline_mode = #tpu.pipeline_mode<synchronous>, transform_indices = @transform_1, window_bounds = array<i64: 32, 128>}, {pipeline_mode = #tpu.pipeline_mode<synchronous>, transform_indices = @transform_2, window_bounds = array<i64: 1, 128>}, {pipeline_mode = #tpu.pipeline_mode<synchronous>, transform_indices = @transform_3, window_bounds = array<i64: 128, 64>}, {pipeline_mode = #tpu.pipeline_mode<synchronous>, transform_indices = @transform_4, window_bounds = array<i64: 1, 64>}, {pipeline_mode = #tpu.pipeline_mode<synchronous>, transform_indices = @transform_5, window_bounds = array<i64: 64, 10>}, {pipeline_mode = #tpu.pipeline_mode<synchronous>, transform_indices = @transform_6, window_bounds = array<i64: 1, 10>}, {transform_indices = @transform_7, window_bounds = array<i64: 16, 10>}]} {
    %c0 = arith.constant 0 : index
    %c0_0 = arith.constant 0 : index
    %0 = vector.load %arg1[%c0, %c0_0] : memref<16x32xf32, #tpu.memory_space<vmem>>, vector<16x32xf32>
    %1 = arith.truncf %0 : vector<16x32xf32> to vector<16x32xbf16>
    %c0_1 = arith.constant 0 : index
    %c0_2 = arith.constant 0 : index
    %2 = vector.load %arg2[%c0_1, %c0_2] : memref<32x128xbf16, #tpu.memory_space<vmem>>, vector<32x128xbf16>
    %cst = arith.constant dense<0.000000e+00> : vector<16x128xf32>
    %3 = tpu.matmul %1, %2, %cst {dimension_numbers = #tpu.dot_dimension_numbers<[1], [0], [0], [1], [0, 0, 1, 1], [], []>} : vector<16x32xbf16>, vector<32x128xbf16>, vector<16x128xf32> -> vector<16x128xf32>
    %c0_3 = arith.constant 0 : index
    %c0_4 = arith.constant 0 : index
    %4 = vector.load %arg3[%c0_3, %c0_4] : memref<1x128xf32, #tpu.memory_space<vmem>>, vector<1x128xf32>
    %5 = vector.broadcast %4 : vector<1x128xf32> to vector<16x128xf32>
    %6 = arith.addf %3, %5 : vector<16x128xf32>
    %cst_5 = arith.constant 0.000000e+00 : f32
    %7 = vector.broadcast %cst_5 : f32 to vector<16x128xf32>
    %8 = arith.maximumf %6, %7 : vector<16x128xf32>
    %9 = arith.truncf %8 : vector<16x128xf32> to vector<16x128xbf16>
    %c0_6 = arith.constant 0 : index
    %c0_7 = arith.constant 0 : index
    %10 = vector.load %arg4[%c0_6, %c0_7] : memref<128x64xbf16, #tpu.memory_space<vmem>>, vector<128x64xbf16>
    %cst_8 = arith.constant dense<0.000000e+00> : vector<16x64xf32>
    %11 = tpu.matmul %9, %10, %cst_8 {dimension_numbers = #tpu.dot_dimension_numbers<[1], [0], [0], [1], [0, 0, 1, 1], [], []>} : vector<16x128xbf16>, vector<128x64xbf16>, vector<16x64xf32> -> vector<16x64xf32>
    %c0_9 = arith.constant 0 : index
    %c0_10 = arith.constant 0 : index
    %12 = vector.load %arg5[%c0_9, %c0_10] : memref<1x64xf32, #tpu.memory_space<vmem>>, vector<1x64xf32>
    %13 = vector.broadcast %12 : vector<1x64xf32> to vector<16x64xf32>
    %14 = arith.addf %11, %13 : vector<16x64xf32>
    %cst_11 = arith.constant 0.000000e+00 : f32
    %15 = vector.broadcast %cst_11 : f32 to vector<16x64xf32>
    %16 = arith.maximumf %14, %15 : vector<16x64xf32>
    %17 = arith.truncf %16 : vector<16x64xf32> to vector<16x64xbf16>
    %c0_12 = arith.constant 0 : index
    %c0_13 = arith.constant 0 : index
    %18 = vector.load %arg6[%c0_12, %c0_13] : memref<64x10xbf16, #tpu.memory_space<vmem>>, vector<64x10xbf16>
    %cst_14 = arith.constant dense<0.000000e+00> : vector<16x10xf32>
    %19 = tpu.matmul %17, %18, %cst_14 {dimension_numbers = #tpu.dot_dimension_numbers<[1], [0], [0], [1], [0, 0, 1, 1], [], []>} : vector<16x64xbf16>, vector<64x10xbf16>, vector<16x10xf32> -> vector<16x10xf32>
    %c0_15 = arith.constant 0 : index
    %c0_16 = arith.constant 0 : index
    %20 = vector.load %arg7[%c0_15, %c0_16] : memref<1x10xf32, #tpu.memory_space<vmem>>, vector<1x10xf32>
    %21 = vector.broadcast %20 : vector<1x10xf32> to vector<16x10xf32>
    %22 = arith.addf %19, %21 : vector<16x10xf32>
    %c0_17 = arith.constant 0 : index
    %c0_18 = arith.constant 0 : index
    %23 = vector.load %arg8[%c0_17, %c0_18] : memref<16x10xf32, #tpu.memory_space<vmem>>, vector<16x10xf32>
    tpu.vector_store %arg8[%c0_17, %c0_18], %22 {strides = array<i32>} : memref<16x10xf32, #tpu.memory_space<vmem>>, vector<16x10xf32>,
    return
  }
  func.func @transform_0(%arg0: i32) -> (i32, i32) {
    %c0_i32 = arith.constant 0 : i32
    %c0_i32_0 = arith.constant 0 : i32
    return %arg0, %c0_i32 : i32, i32
  }
  func.func @transform_1(%arg0: i32) -> (i32, i32) {
    %c0_i32 = arith.constant 0 : i32
    %c0_i32_0 = arith.constant 0 : i32
    %c0_i32_1 = arith.constant 0 : i32
    return %c0_i32, %c0_i32_0 : i32, i32
  }
  func.func @transform_2(%arg0: i32) -> (i32, i32) {
    %c0_i32 = arith.constant 0 : i32
    %c0_i32_0 = arith.constant 0 : i32
    %c0_i32_1 = arith.constant 0 : i32
    return %c0_i32, %c0_i32_0 : i32, i32
  }
  func.func @transform_3(%arg0: i32) -> (i32, i32) {
    %c0_i32 = arith.constant 0 : i32
    %c0_i32_0 = arith.constant 0 : i32
    %c0_i32_1 = arith.constant 0 : i32
    return %c0_i32, %c0_i32_0 : i32, i32
  }
  func.func @transform_4(%arg0: i32) -> (i32, i32) {
    %c0_i32 = arith.constant 0 : i32
    %c0_i32_0 = arith.constant 0 : i32
    %c0_i32_1 = arith.constant 0 : i32
    return %c0_i32, %c0_i32_0 : i32, i32
  }
  func.func @transform_5(%arg0: i32) -> (i32, i32) {
    %c0_i32 = arith.constant 0 : i32
    %c0_i32_0 = arith.constant 0 : i32
    %c0_i32_1 = arith.constant 0 : i32
    return %c0_i32, %c0_i32_0 : i32, i32
  }
  func.func @transform_6(%arg0: i32) -> (i32, i32) {
    %c0_i32 = arith.constant 0 : i32
    %c0_i32_0 = arith.constant 0 : i32
    %c0_i32_1 = arith.constant 0 : i32
    return %c0_i32, %c0_i32_0 : i32, i32
  }
  func.func @transform_7(%arg0: i32) -> (i32, i32) {
    %c0_i32 = arith.constant 0 : i32
    %c0_i32_0 = arith.constant 0 : i32
    return %arg0, %c0_i32 : i32, i32
  }
}

</mosaic_0001>

<llo_original>
// kernel: logistic_regression_forward.1
$region0: #{logistic_regression_forward.1}
  #allocation0 [shape = 'u32[]', space=smem, size = 0x4, offset = 0x4, fixed_abs, tag = 'smem constant byte address 0x4 - core index']
  #allocation1 [shape = 'u32[144,128]{1,0:T(1,128)}', space=vmem, size = 0x12000, scoped, tag = 'internal scratch']
  %s0 = inlined_call_operand.vmem [shape: f32[16,32], index: 0, kind: input, shape index: {}]
  %s1 = inlined_call_operand.vmem [shape: bf16[32,128], index: 1, kind: input, shape index: {}]
  %s2 = inlined_call_operand.vmem [shape: f32[1,128], index: 2, kind: input, shape index: {}]
  %s3 = inlined_call_operand.vmem [shape: bf16[128,64], index: 3, kind: input, shape index: {}]
  %s4 = inlined_call_operand.vmem [shape: f32[1,64], index: 4, kind: input, shape index: {}]
  %s5 = inlined_call_operand.vmem [shape: bf16[64,10], index: 5, kind: input, shape index: {}]
  %s6 = inlined_call_operand.vmem [shape: f32[1,10], index: 6, kind: input, shape index: {}]
  %s7 = inlined_call_operand.vmem [shape: f32[16,10], index: 7, kind: output, shape index: {}]
  %s8 = sld [smem:[#allocation0]]
  $region38: #{logistic_regression_forward.1} parent=0
    _
  %s10 = ssub.s32 1, %s8
  %s11 = scalar_select 0, %s10, %s8
  // Predicated region
  $region2: #{logistic_regression_forward.1} parent=0 // pred_check
    _
  $region3: #{logistic_regression_forward.1} parent=0 // pred_check_branch
    %13 = sbr.rel (0) target = $region5
  $region4: #{logistic_regression_forward.1} parent=0 // pred_region
    _
  $region5: #{logistic_regression_forward.1} parent=0 // pred_fallthru
    _
  // Predicated region
  $region6: #{logistic_regression_forward.1} parent=0 // pred_check
    _
  $region7: #{logistic_regression_forward.1} parent=0 // pred_check_branch
    %15 = sbr.rel (0) target = $region9
  $region8: #{logistic_regression_forward.1} parent=0 // pred_region
    _
  $region9: #{logistic_regression_forward.1} parent=0 // pred_fallthru
    _
  // Predicated region
  $region10: #{logistic_regression_forward.1} parent=0 // pred_check
    _
  $region11: #{logistic_regression_forward.1} parent=0 // pred_check_branch
    %17 = sbr.rel (0) target = $region13
  $region12: #{logistic_regression_forward.1} parent=0 // pred_region
    _
  $region13: #{logistic_regression_forward.1} parent=0 // pred_fallthru
    _
  // Predicated region
  $region14: #{logistic_regression_forward.1} parent=0 // pred_check
    _
  $region15: #{logistic_regression_forward.1} parent=0 // pred_check_branch
    %19 = sbr.rel (0) target = $region17
  $region16: #{logistic_regression_forward.1} parent=0 // pred_region
    _
  $region17: #{logistic_regression_forward.1} parent=0 // pred_fallthru
    _
  // Predicated region
  $region18: #{logistic_regression_forward.1} parent=0 // pred_check
    _
  $region19: #{logistic_regression_forward.1} parent=0 // pred_check_branch
    %21 = sbr.rel (0) target = $region21
  $region20: #{logistic_regression_forward.1} parent=0 // pred_region
    _
  $region21: #{logistic_regression_forward.1} parent=0 // pred_fallthru
    _
  // Predicated region
  $region22: #{logistic_regression_forward.1} parent=0 // pred_check
    _
  $region23: #{logistic_regression_forward.1} parent=0 // pred_check_branch
    %23 = sbr.rel (0) target = $region25
  $region24: #{logistic_regression_forward.1} parent=0 // pred_region
    _
  $region25: #{logistic_regression_forward.1} parent=0 // pred_fallthru
    _
  // Predicated region
  $region26: #{logistic_regression_forward.1} parent=0 // pred_check
    _
  $region27: #{logistic_regression_forward.1} parent=0 // pred_check_branch
    %25 = sbr.rel (0) target = $region29
  $region28: #{logistic_regression_forward.1} parent=0 // pred_region
    _
  $region29: #{logistic_regression_forward.1} parent=0 // pred_fallthru
    _
  %v27 = vld [vmem:[%s0] sm:$0xff]
  %v28 = vld [vmem:[%s0 + $0x8] sm:$0xff]
  %v29 = vpack.c.bf16 %v28, %v27
  %v30 = vld [vmem:[%s1] sm:$0xf]
  %v31 = vld [vmem:[%s1 + $0x4] sm:$0xf]
  %v32 = vld [vmem:[%s1 + $0x8] sm:$0xf]
  %v33 = vld [vmem:[%s1 + $0xc] sm:$0xf]
  %v34 = vld [vmem:[%s2] sm:$0x1]
  %v36 = vlaneseq
  %v37 = vshrl.u32 %v36, 7
  %v38 = vsub.s32 0, %v37
  %v39 = vrot.slane %v34, %v38
  %v45 = vunpack.c.l.b16 %v30
  %v46 = vunpack.c.l.b16 %v31
  %v47 = vunpack.c.l.b16 %v32
  %v48 = vunpack.c.l.b16 %v33
  %v49 = vpack.c.b16 %v46, %v45
  %v50 = vpack.c.b16 %v48, %v47
  %vm53 = vcmask 261120
  %v55 = vsel %vm53, %v29, 0
  %57 = vmatprep.subr.bf16.mxu0 0
  %58 = vmatpush1.bf16.msra.mxu0 %v49
  %59 = vmatprep.subr.bf16.mxu0 0
  %60 = vmatpush1.bf16.msra.mxu0 %v50
  %61 = vmatprep.subr.bf16.mxu0 0
  %62 = vmatpush1.bf16.msra.mxu0 0
  %63 = vmatprep.subr.bf16.mxu0 0
  %64 = vmatpush1.bf16.msra.mxu0 0
  %65 = vmatprep.subr.bf16.mxu0 0
  %66 = vmatpush1.bf16.msra.mxu0 0
  %67 = vmatprep.subr.bf16.mxu0 0
  %68 = vmatpush1.bf16.msra.mxu0 0
  %69 = vmatprep.subr.bf16.mxu0 0
  %70 = vmatpush1.bf16.msra.mxu0 0
  %71 = vmatprep.subr.bf16.mxu0 0
  %72 = vmatpush1.bf16.msra.mxu0 0
  %73 = vmatprep.subr.bf16.mxu0 0
  %74 = vmatpush1.bf16.msra.mxu0 0
  %75 = vmatprep.subr.bf16.mxu0 0
  %76 = vmatpush1.bf16.msra.mxu0 0
  %77 = vmatprep.subr.bf16.mxu0 0
  %78 = vmatpush1.bf16.msra.mxu0 0
  %79 = vmatprep.subr.bf16.mxu0 0
  %80 = vmatpush1.bf16.msra.mxu0 0
  %81 = vmatprep.subr.bf16.mxu0 0
  %82 = vmatpush1.bf16.msra.mxu0 0
  %83 = vmatprep.subr.bf16.mxu0 0
  %84 = vmatpush1.bf16.msra.mxu0 0
  %85 = vmatprep.subr.bf16.mxu0 0
  %86 = vmatpush1.bf16.msra.mxu0 0
  %87 = vmatprep.subr.bf16.mxu0 0
  %88 = vmatpush1.bf16.msra.mxu0 0
  %89 = vmatprep.mubr.bf16.mxu0 0
  %90 = vmatmul.mubr.bf16.gmra.mrb[0].mxu0 %v55
  %v91 = vpop.f32.mrb[0].mxu0
  %v92 = vadd.f32 %v39, %v91
  %v93 = vpop.f32.mrb[0].mxu0
  %v94 = vpop.f32.mrb[0].mxu0
  %v95 = vadd.f32 %v39, %v94
  %v96 = vpop.f32.mrb[0].mxu0
  %97 = vdwg.mxu0
  %v98 = vmax.f32 %v92, 0.0
  %v99 = vmax.f32 %v95, 0.0
  %v100 = vpack.c.bf16 %v99, %v98
  %v101 = vld [vmem:[%s3] sm:$0xf]
  %v102 = vld [vmem:[%s3 + $0x4] sm:$0xf]
  %v103 = vld [vmem:[%s3 + $0x8] sm:$0xf]
  %v104 = vld [vmem:[%s3 + $0xc] sm:$0xf]
  %v105 = vld [vmem:[%s3 + $0x10] sm:$0xf]
  %v106 = vld [vmem:[%s3 + $0x14] sm:$0xf]
  %v107 = vld [vmem:[%s3 + $0x18] sm:$0xf]
  %v108 = vld [vmem:[%s3 + $0x1c] sm:$0xf]
  %v109 = vld [vmem:[%s3 + $0x20] sm:$0xf]
  %v110 = vld [vmem:[%s3 + $0x24] sm:$0xf]
  %v111 = vld [vmem:[%s3 + $0x28] sm:$0xf]
  %v112 = vld [vmem:[%s3 + $0x2c] sm:$0xf]
  %v113 = vld [vmem:[%s3 + $0x30] sm:$0xf]
  %v114 = vld [vmem:[%s3 + $0x34] sm:$0xf]
  %v115 = vld [vmem:[%s3 + $0x38] sm:$0xf]
  %v116 = vld [vmem:[%s3 + $0x3c] sm:$0xf]
  %v117 = vld [vmem:[%s4] sm:$0x1]
  %v119 = vlaneseq
  %v120 = vshrl.u32 %v119, 7
  %v121 = vsub.s32 0, %v120
  %v122 = vrot.slane %v117, %v121
  %v140 = vunpack.c.l.b16 %v101
  %v141 = vunpack.c.l.b16 %v102
  %v142 = vunpack.c.l.b16 %v103
  %v143 = vunpack.c.l.b16 %v104
  %v144 = vunpack.c.l.b16 %v105
  %v145 = vunpack.c.l.b16 %v106
  %v146 = vunpack.c.l.b16 %v107
  %v147 = vunpack.c.l.b16 %v108
  %v148 = vunpack.c.l.b16 %v109
  %v149 = vunpack.c.l.b16 %v110
  %v150 = vunpack.c.l.b16 %v111
  %v151 = vunpack.c.l.b16 %v112
  %v152 = vunpack.c.l.b16 %v113
  %v153 = vunpack.c.l.b16 %v114
  %v154 = vunpack.c.l.b16 %v115
  %v155 = vunpack.c.l.b16 %v116
  %v156 = vpack.c.b16 %v141, %v140
  %v157 = vpack.c.b16 %v143, %v142
  %v158 = vpack.c.b16 %v145, %v144
  %v159 = vpack.c.b16 %v147, %v146
  %v160 = vpack.c.b16 %v149, %v148
  %v161 = vpack.c.b16 %v151, %v150
  %v162 = vpack.c.b16 %v153, %v152
  %v163 = vpack.c.b16 %v155, %v154
  %172 = vmatprep.subr.bf16.mxu0 0
  %173 = vmatpush1.bf16.msra.mxu0 %v156
  %174 = vmatprep.subr.bf16.mxu0 0
  %175 = vmatpush1.bf16.msra.mxu0 %v157
  %176 = vmatprep.subr.bf16.mxu0 0
  %177 = vmatpush1.bf16.msra.mxu0 %v158
  %178 = vmatprep.subr.bf16.mxu0 0
  %179 = vmatpush1.bf16.msra.mxu0 %v159
  %180 = vmatprep.subr.bf16.mxu0 0
  %181 = vmatpush1.bf16.msra.mxu0 %v160
  %182 = vmatprep.subr.bf16.mxu0 0
  %183 = vmatpush1.bf16.msra.mxu0 %v161
  %184 = vmatprep.subr.bf16.mxu0 0
  %185 = vmatpush1.bf16.msra.mxu0 %v162
  %186 = vmatprep.subr.bf16.mxu0 0
  %187 = vmatpush1.bf16.msra.mxu0 %v163
  %188 = vmatprep.subr.bf16.mxu0 0
  %189 = vmatpush1.bf16.msra.mxu0 0
  %190 = vmatprep.subr.bf16.mxu0 0
  %191 = vmatpush1.bf16.msra.mxu0 0
  %192 = vmatprep.subr.bf16.mxu0 0
  %193 = vmatpush1.bf16.msra.mxu0 0
  %194 = vmatprep.subr.bf16.mxu0 0
  %195 = vmatpush1.bf16.msra.mxu0 0
  %196 = vmatprep.subr.bf16.mxu0 0
  %197 = vmatpush1.bf16.msra.mxu0 0
  %198 = vmatprep.subr.bf16.mxu0 0
  %199 = vmatpush1.bf16.msra.mxu0 0
  %200 = vmatprep.subr.bf16.mxu0 0
  %201 = vmatpush1.bf16.msra.mxu0 0
  %202 = vmatprep.subr.bf16.mxu0 0
  %203 = vmatpush1.bf16.msra.mxu0 0
  %204 = vmatprep.mubr.bf16.mxu0 0
  %205 = vmatmul.mubr.bf16.gmra.mrb[0].mxu0 %v100
  %v206 = vpop.f32.mrb[0].mxu0
  %v207 = vadd.f32 %v122, %v206
  %v208 = vpop.f32.mrb[0].mxu0
  %v209 = vpop.f32.mrb[0].mxu0
  %v210 = vadd.f32 %v122, %v209
  %v211 = vpop.f32.mrb[0].mxu0
  %212 = vdwg.mxu0
  %v213 = vmax.f32 %v207, 0.0
  %v214 = vmax.f32 %v210, 0.0
  %v215 = vpack.c.bf16 %v214, %v213
  %v216 = vld [vmem:[%s5] sm:$0xf]
  %v217 = vld [vmem:[%s5 + $0x4] sm:$0xf]
  %v218 = vld [vmem:[%s5 + $0x8] sm:$0xf]
  %v219 = vld [vmem:[%s5 + $0xc] sm:$0xf]
  %v220 = vld [vmem:[%s5 + $0x10] sm:$0xf]
  %v221 = vld [vmem:[%s5 + $0x14] sm:$0xf]
  %v222 = vld [vmem:[%s5 + $0x18] sm:$0xf]
  %v223 = vld [vmem:[%s5 + $0x1c] sm:$0xf]
  %v224 = vld [vmem:[%s6] sm:$0x1]
  %v226 = vlaneseq
  %v227 = vshrl.u32 %v226, 7
  %v228 = vsub.s32 0, %v227
  %v229 = vrot.slane %v224, %v228
  %v239 = vunpack.c.l.b16 %v216
  %v240 = vunpack.c.l.b16 %v217
  %v241 = vunpack.c.l.b16 %v218
  %v242 = vunpack.c.l.b16 %v219
  %v243 = vunpack.c.l.b16 %v220
  %v244 = vunpack.c.l.b16 %v221
  %v245 = vunpack.c.l.b16 %v222
  %v246 = vunpack.c.l.b16 %v223
  %v247 = vpack.c.b16 %v240, %v239
  %v248 = vpack.c.b16 %v242, %v241
  %v249 = vpack.c.b16 %v244, %v243
  %v250 = vpack.c.b16 %v246, %v245
  %vm255 = vcmask 523264
  %v257 = vsel %vm255, %v215, 0
  %259 = vmatprep.subr.bf16.mxu0 0
  %260 = vmatpush1.bf16.msra.mxu0 %v247
  %261 = vmatprep.subr.bf16.mxu0 0
  %262 = vmatpush1.bf16.msra.mxu0 %v248
  %263 = vmatprep.subr.bf16.mxu0 0
  %264 = vmatpush1.bf16.msra.mxu0 %v249
  %265 = vmatprep.subr.bf16.mxu0 0
  %266 = vmatpush1.bf16.msra.mxu0 %v250
  %267 = vmatprep.subr.bf16.mxu0 0
  %268 = vmatpush1.bf16.msra.mxu0 0
  %269 = vmatprep.subr.bf16.mxu0 0
  %270 = vmatpush1.bf16.msra.mxu0 0
  %271 = vmatprep.subr.bf16.mxu0 0
  %272 = vmatpush1.bf16.msra.mxu0 0
  %273 = vmatprep.subr.bf16.mxu0 0
  %274 = vmatpush1.bf16.msra.mxu0 0
  %275 = vmatprep.subr.bf16.mxu0 0
  %276 = vmatpush1.bf16.msra.mxu0 0
  %277 = vmatprep.subr.bf16.mxu0 0
  %278 = vmatpush1.bf16.msra.mxu0 0
  %279 = vmatprep.subr.bf16.mxu0 0
  %280 = vmatpush1.bf16.msra.mxu0 0
  %281 = vmatprep.subr.bf16.mxu0 0
  %282 = vmatpush1.bf16.msra.mxu0 0
  %283 = vmatprep.subr.bf16.mxu0 0
  %284 = vmatpush1.bf16.msra.mxu0 0
  %285 = vmatprep.subr.bf16.mxu0 0
  %286 = vmatpush1.bf16.msra.mxu0 0
  %287 = vmatprep.subr.bf16.mxu0 0
  %288 = vmatpush1.bf16.msra.mxu0 0
  %289 = vmatprep.subr.bf16.mxu0 0
  %290 = vmatpush1.bf16.msra.mxu0 0
  %291 = vmatprep.mubr.bf16.mxu0 0
  %292 = vmatmul.mubr.bf16.gmra.mrb[0].mxu0 %v257
  %v293 = vpop.f32.mrb[0].mxu0
  %v294 = vadd.f32 %v229, %v293
  %v295 = vpop.f32.mrb[0].mxu0
  %v296 = vpop.f32.mrb[0].mxu0
  %v297 = vadd.f32 %v229, %v296
  %v298 = vpop.f32.mrb[0].mxu0
  %299 = vdwg.mxu0
  %vm300 = vcmask 80896
  %301 = vst.msk [vmem:[%s7] sm:$0xff] %vm300, %v294
  %302 = vst.msk [vmem:[%s7 + $0x8] sm:$0xff] %vm300, %v297
  // Predicated region
  $region30: #{logistic_regression_forward.1} parent=0 // pred_check
    _
  $region31: #{logistic_regression_forward.1} parent=0 // pred_check_branch
    %304 = sbr.rel (0) target = $region33
  $region32: #{logistic_regression_forward.1} parent=0 // pred_region
    _
  $region33: #{logistic_regression_forward.1} parent=0 // pred_fallthru
    _
  // Predicated region
  $region34: #{logistic_regression_forward.1} parent=0 // pred_check
    _
  $region35: #{logistic_regression_forward.1} parent=0 // pred_check_branch
    %306 = sbr.rel (0) target = $region37
  $region36: #{logistic_regression_forward.1} parent=0 // pred_region
    _
  $region37: #{logistic_regression_forward.1} parent=0 // pred_fallthru
    _

</llo_original>
